<compile_context>
chip_gen: v5e
topology: v5e:2x2
jax: 0.10.0
libtpu: 0.0.40
codegen_flags: <defaults>
</compile_context>

<pallas_src>
import functools

import jax
import jax.numpy as jnp
from jax.experimental import pallas as pl
from jax.experimental.pallas import tpu as pltpu


def kar_kernel(user_ref, item_ref, wbig_ref, bbig_ref, w2_ref, b2_ref, out_ref, *,
               experts_num: int, output_dim: int, hidden_total: int):
    """One batch tile of the fused KAR forward.

    user_ref: (TB, Du)           item_ref: (TB, Di)
    wbig_ref: (Du+Di, E*H + E*O) bbig_ref: (1, E*H + E*O)
    w2_ref:   (E*H, E*O)         b2_ref:   (1, E*O)
    out_ref:  (TB, O)
    """
    E, O, EH = experts_num, output_dim, hidden_total

    # Build the pair once per tile in VMEM (16+16 lanes -> one shift+select).
    pair = jnp.concatenate([user_ref[...], item_ref[...]], axis=-1)

    # Single fused matmul: expert-hidden (lanes [:EH]) and expanded gate
    # (lanes [EH:]) in one (TB, 32) @ (32, 256) MXU op.
    r = jnp.dot(pair, wbig_ref[...], preferred_element_type=jnp.float32)
    r = r + bbig_ref[...]
    h = jnp.maximum(r[:, :EH], 0.0)          # Linear + ReLU (expert first layers)
    gate_exp = r[:, EH:]                     # raw gate, repeated O times per expert

    # Fused second layer: block-diagonal (E*H, E*O) matmul, lane-dense 128x128.
    o = jnp.dot(h, w2_ref[...], preferred_element_type=jnp.float32)
    o = jnp.maximum(o + b2_ref[...], 0.0)    # Linear + ReLU (expert second layers)

    # Gated mixture: out[:, j] = sum_e o[:, e*O+j] * gate[:, e].
    # gate_exp is lane-aligned with o, so this is a plain VPU multiply followed
    # by a cyclic tree reduce over expert blocks using XLU rolls.
    p = o * gate_exp
    if E > 1 and (E & (E - 1)) == 0:
        e = E
        while e > 1:
            e //= 2
            p = p + pltpu.roll(p, shift=e * O, axis=1)
        acc = p[:, :O]
    else:
        # Fallback for non-power-of-two expert counts.
        acc = p[:, :O]
        for i in range(1, E):
            acc = acc + p[:, i * O:(i + 1) * O]

    out_ref[...] = acc.astype(out_ref.dtype)


def pack_params(params):
    """One-time repack of per-expert weights into the fused lane-dense layout."""
    w1, b1, w2, b2, wg, bg = params       # (E,D,H) (E,1,H) (E,H,O) (E,1,O) (D,E) (1,E)
    E, D, H = w1.shape
    O = w2.shape[-1]

    # Expert first layers fused over experts: (D, E*H); column e*H+h <- w1[e,:,h].
    w1_flat = jnp.transpose(w1, (1, 0, 2)).reshape(D, E * H)
    b1_flat = b1.reshape(1, E * H)

    # Gate expanded so its lanes line up with the expert outputs: (D, E*O).
    wg_exp = jnp.repeat(wg, O, axis=1)
    bg_exp = jnp.repeat(bg, O, axis=1)

    # One big first-stage weight/bias: [experts' first layers | expanded gate].
    w_big = jnp.concatenate([w1_flat, wg_exp], axis=1)        # (D, E*H + E*O)
    b_big = jnp.concatenate([b1_flat, bg_exp], axis=1)        # (1, E*H + E*O)

    # Expert second layers as one block-diagonal (E*H, E*O) matrix.
    w2_bd = jnp.zeros((E * H, E * O), w2.dtype)
    for e in range(E):
        w2_bd = w2_bd.at[e * H:(e + 1) * H, e * O:(e + 1) * O].set(w2[e])
    b2_flat = b2.reshape(1, E * O)

    return dict(w_big=w_big, b_big=b_big, w2_bd=w2_bd, b2=b2_flat,
                experts_num=E, output_dim=O, hidden_total=E * H)


def _round_up(x, m):
    return ((x + m - 1) // m) * m


def _default_batch_tile(B):
    # Large tiles amortize the ~0.35 us/grid-step overhead; >= 2 tiles lets the
    # "parallel" batch axis split across v7x's two TensorCores. 1024 rows keeps
    # double-buffered activations at a few MiB — tiny vs VMEM on v5e/v6e/v7x.
    if B <= 8:
        return max(B, 1)
    return min(1024, _round_up(pl.cdiv(B, 2), 8))


def kar_forward(user_emb, item_emb, packed, *, batch_tile=None):
    """Batch-tiled Pallas call; fused weights stay resident in VMEM across tiles."""
    w_big, b_big, w2_bd, b2 = (packed["w_big"], packed["b_big"],
                               packed["w2_bd"], packed["b2"])
    E = packed["experts_num"]
    O = packed["output_dim"]
    EH = packed["hidden_total"]

    B, Du = user_emb.shape
    Di = item_emb.shape[-1]
    D = Du + Di
    N1 = w_big.shape[-1]        # E*H + E*O
    EO = w2_bd.shape[-1]        # E*O

    TB = batch_tile if batch_tile is not None else _default_batch_tile(B)
    grid = (pl.cdiv(B, TB),)

    const2d = lambda i: (0, 0)   # weights/biases: single block, VMEM-resident
    row_map = lambda i: (i, 0)   # activations/output: tiled over batch
    # NOTE: if forced to tiny TB (very small B), pipeline_mode=pl.Buffered(3) on the
    # activation specs would deepen buffering; unnecessary at the default tile sizes.

    itemsize = jnp.dtype(user_emb.dtype).itemsize
    weight_bytes = 4 * (D * N1 + N1 + EH * EO + EO)
    cost = pl.CostEstimate(
        flops=2 * B * (D * N1 + EH * EO) + 2 * B * EO,
        transcendentals=0,
        bytes_accessed=itemsize * B * (Du + Di) + 4 * B * O + weight_bytes,
    )

    kernel = functools.partial(kar_kernel, experts_num=E, output_dim=O,
                               hidden_total=EH)
    return pl.pallas_call(
        kernel,
        out_shape=jax.ShapeDtypeStruct((B, O), jnp.float32),
        grid=grid,
        in_specs=[
            pl.BlockSpec((TB, Du), row_map),
            pl.BlockSpec((TB, Di), row_map),
            pl.BlockSpec((D, N1), const2d),
            pl.BlockSpec((1, N1), const2d),
            pl.BlockSpec((EH, EO), const2d),
            pl.BlockSpec((1, EO), const2d),
        ],
        out_specs=pl.BlockSpec((TB, O), row_map),
        compiler_params=pltpu.CompilerParams(
            dimension_semantics=("parallel",)),   # megacore split on v7x
        cost_estimate=cost,
    )(user_emb, item_emb, w_big, b_big, w2_bd, b2)


def kar_reference(user_emb, item_emb, params):
    """Pure-JAX reference mirroring the PyTorch forward, for verification."""
    w1, b1, w2, b2, wg, bg = params
    pair = jnp.concatenate([user_emb, item_emb], axis=-1)
    gate = pair @ wg + bg[0]                                   # (B, E), no softmax
    outs = []
    for e in range(w1.shape[0]):
        h = jax.nn.relu(pair @ w1[e] + b1[e, 0])
        o = jax.nn.relu(h @ w2[e] + b2[e, 0])
        outs.append(o)
    experts = jnp.stack(outs, axis=-1)                         # (B, O, E)
    return jnp.einsum("boe,be->bo", experts, gate)


def init_params(key, user_dim, item_dim, output_dim, experts_num, hidden_dim):
    """Deterministic synthetic init (shapes match the PyTorch module's layers)."""
    D = user_dim + item_dim
    H = hidden_dim
    ks = jax.random.split(key, 6)
    scale = 0.1
    w1 = scale * jax.random.normal(ks[0], (experts_num, D, H), jnp.float32)
    b1 = scale * jax.random.normal(ks[1], (experts_num, 1, H), jnp.float32)
    b2 = scale * jax.random.normal(ks[3], (experts_num, 1, output_dim), jnp.float32)
    w2 = scale * jax.random.normal(ks[2], (experts_num, H, output_dim), jnp.float32)
    wg = scale * jax.random.normal(ks[4], (D, experts_num), jnp.float32)
    bg = scale * jax.random.normal(ks[5], (1, experts_num), jnp.float32)
    return (w1, b1, w2, b2, wg, bg)


if __name__ == "__main__":
    B = 32
    USER_DIM = 16
    ITEM_DIM = 16
    OUTPUT_DIM = 32
    EXPERTS_NUM = 4
    HIDDEN_DIM = 32            # experts_hidden_dim = [32]  ->  E*H = 128 lanes

    root = jax.random.PRNGKey(0)
    k_u, k_i, k_p = jax.random.split(root, 3)
    user_emb = jax.random.normal(k_u, (B, USER_DIM), jnp.float32)
    item_emb = jax.random.normal(k_i, (B, ITEM_DIM), jnp.float32)
    params = init_params(k_p, USER_DIM, ITEM_DIM, OUTPUT_DIM, EXPERTS_NUM,
                         HIDDEN_DIM)
    packed = pack_params(params)

    # Default tile -> TB=16, grid=(2,): >=2 tiles (megacore-friendly), 8-aligned.
    out = kar_forward(user_emb, item_emb, packed)
    out = jax.block_until_ready(out)

    ref = kar_reference(user_emb, item_emb, params)
    assert out.shape == (B, OUTPUT_DIM), out.shape
    assert jnp.allclose(out, ref, atol=1e-5, rtol=1e-4), (
        "Pallas kernel mismatch vs reference")

    print("KERNEL_OK")
</pallas_src>

<mosaic_0001>
module attributes {stable_mosaic.version = 11 : i64} {
  func.func @kar_kernel(%arg0: i32, %arg1: memref<16x16xf32, #tpu.memory_space<vmem>>, %arg2: memref<16x16xf32, #tpu.memory_space<vmem>>, %arg3: memref<32x256xf32, #tpu.memory_space<vmem>>, %arg4: memref<1x256xf32, #tpu.memory_space<vmem>>, %arg5: memref<128x128xf32, #tpu.memory_space<vmem>>, %arg6: memref<1x128xf32, #tpu.memory_space<vmem>>, %arg7: memref<16x32xf32, #tpu.memory_space<vmem>>) attributes {dimension_semantics = [#tpu.dimension_semantics<parallel>], iteration_bounds = array<i64: 2>, scalar_prefetch = 0 : i64, scratch_operands = 0 : i64, tpu.core_type = #tpu.core_type<tc>, window_params = [{transform_indices = @transform_0, window_bounds = array<i64: 16, 16>}, {transform_indices = @transform_1, window_bounds = array<i64: 16, 16>}, {pipeline_mode = #tpu.pipeline_mode<synchronous>, transform_indices = @transform_2, window_bounds = array<i64: 32, 256>}, {pipeline_mode = #tpu.pipeline_mode<synchronous>, transform_indices = @transform_3, window_bounds = array<i64: 1, 256>}, {pipeline_mode = #tpu.pipeline_mode<synchronous>, transform_indices = @transform_4, window_bounds = array<i64: 128, 128>}, {pipeline_mode = #tpu.pipeline_mode<synchronous>, transform_indices = @transform_5, window_bounds = array<i64: 1, 128>}, {transform_indices = @transform_6, window_bounds = array<i64: 16, 32>}]} {
    %c0 = arith.constant 0 : index
    %c0_0 = arith.constant 0 : index
    %0 = vector.load %arg1[%c0, %c0_0] : memref<16x16xf32, #tpu.memory_space<vmem>>, vector<16x16xf32>
    %c0_1 = arith.constant 0 : index
    %c0_2 = arith.constant 0 : index
    %1 = vector.load %arg2[%c0_1, %c0_2] : memref<16x16xf32, #tpu.memory_space<vmem>>, vector<16x16xf32>
    %2 = tpu.concatenate %0, %1 in 1 : vector<16x16xf32>, vector<16x16xf32> -> vector<16x32xf32>
    %c0_3 = arith.constant 0 : index
    %c0_4 = arith.constant 0 : index
    %3 = vector.load %arg3[%c0_3, %c0_4] : memref<32x256xf32, #tpu.memory_space<vmem>>, vector<32x256xf32>
    %cst = arith.constant dense<0.000000e+00> : vector<16x256xf32>
    %4 = tpu.matmul %2, %3, %cst {dimension_numbers = #tpu.dot_dimension_numbers<[1], [0], [0], [1], [0, 0, 1, 1], [], []>} : vector<16x32xf32>, vector<32x256xf32>, vector<16x256xf32> -> vector<16x256xf32>
    %c0_5 = arith.constant 0 : index
    %c0_6 = arith.constant 0 : index
    %5 = vector.load %arg4[%c0_5, %c0_6] : memref<1x256xf32, #tpu.memory_space<vmem>>, vector<1x256xf32>
    %6 = vector.broadcast %5 : vector<1x256xf32> to vector<16x256xf32>
    %7 = arith.addf %4, %6 : vector<16x256xf32>
    %8 = vector.extract_strided_slice %7 {offsets = [0, 0], sizes = [16, 128], strides = [1, 1]} : vector<16x256xf32> to vector<16x128xf32>
    %cst_7 = arith.constant 0.000000e+00 : f32
    %9 = vector.broadcast %cst_7 : f32 to vector<16x128xf32>
    %10 = arith.maximumf %8, %9 : vector<16x128xf32>
    %11 = vector.extract_strided_slice %7 {offsets = [0, 128], sizes = [16, 128], strides = [1, 1]} : vector<16x256xf32> to vector<16x128xf32>
    %c0_8 = arith.constant 0 : index
    %c0_9 = arith.constant 0 : index
    %12 = vector.load %arg5[%c0_8, %c0_9] : memref<128x128xf32, #tpu.memory_space<vmem>>, vector<128x128xf32>
    %cst_10 = arith.constant dense<0.000000e+00> : vector<16x128xf32>
    %13 = tpu.matmul %10, %12, %cst_10 {dimension_numbers = #tpu.dot_dimension_numbers<[1], [0], [0], [1], [0, 0, 1, 1], [], []>} : vector<16x128xf32>, vector<128x128xf32>, vector<16x128xf32> -> vector<16x128xf32>
    %c0_11 = arith.constant 0 : index
    %c0_12 = arith.constant 0 : index
    %14 = vector.load %arg6[%c0_11, %c0_12] : memref<1x128xf32, #tpu.memory_space<vmem>>, vector<1x128xf32>
    %15 = vector.broadcast %14 : vector<1x128xf32> to vector<16x128xf32>
    %16 = arith.addf %13, %15 : vector<16x128xf32>
    %cst_13 = arith.constant 0.000000e+00 : f32
    %17 = vector.broadcast %cst_13 : f32 to vector<16x128xf32>
    %18 = arith.maximumf %16, %17 : vector<16x128xf32>
    %19 = arith.mulf %18, %11 : vector<16x128xf32>
    %c64_i32 = arith.constant 64 : i32
    %20 = tpu.dynamic_rotate %19 by %c64_i32 dim 1 : vector<16x128xf32>, i32 -> vector<16x128xf32>
    %21 = arith.addf %19, %20 : vector<16x128xf32>
    %c32_i32 = arith.constant 32 : i32
    %22 = tpu.dynamic_rotate %21 by %c32_i32 dim 1 : vector<16x128xf32>, i32 -> vector<16x128xf32>
    %23 = arith.addf %21, %22 : vector<16x128xf32>
    %24 = vector.extract_strided_slice %23 {offsets = [0, 0], sizes = [16, 32], strides = [1, 1]} : vector<16x128xf32> to vector<16x32xf32>
    %c0_14 = arith.constant 0 : index
    %c0_15 = arith.constant 0 : index
    %25 = vector.load %arg7[%c0_14, %c0_15] : memref<16x32xf32, #tpu.memory_space<vmem>>, vector<16x32xf32>
    tpu.vector_store %arg7[%c0_14, %c0_15], %24 {strides = array<i32>} : memref<16x32xf32, #tpu.memory_space<vmem>>, vector<16x32xf32>,
    return
  }
  func.func @transform_0(%arg0: i32) -> (i32, i32) {
    %c0_i32 = arith.constant 0 : i32
    %c0_i32_0 = arith.constant 0 : i32
    return %arg0, %c0_i32 : i32, i32
  }
  func.func @transform_1(%arg0: i32) -> (i32, i32) {
    %c0_i32 = arith.constant 0 : i32
    %c0_i32_0 = arith.constant 0 : i32
    return %arg0, %c0_i32 : i32, i32
  }
  func.func @transform_2(%arg0: i32) -> (i32, i32) {
    %c0_i32 = arith.constant 0 : i32
    %c0_i32_0 = arith.constant 0 : i32
    %c0_i32_1 = arith.constant 0 : i32
    return %c0_i32, %c0_i32_0 : i32, i32
  }
  func.func @transform_3(%arg0: i32) -> (i32, i32) {
    %c0_i32 = arith.constant 0 : i32
    %c0_i32_0 = arith.constant 0 : i32
    %c0_i32_1 = arith.constant 0 : i32
    return %c0_i32, %c0_i32_0 : i32, i32
  }
  func.func @transform_4(%arg0: i32) -> (i32, i32) {
    %c0_i32 = arith.constant 0 : i32
    %c0_i32_0 = arith.constant 0 : i32
    %c0_i32_1 = arith.constant 0 : i32
    return %c0_i32, %c0_i32_0 : i32, i32
  }
  func.func @transform_5(%arg0: i32) -> (i32, i32) {
    %c0_i32 = arith.constant 0 : i32
    %c0_i32_0 = arith.constant 0 : i32
    %c0_i32_1 = arith.constant 0 : i32
    return %c0_i32, %c0_i32_0 : i32, i32
  }
  func.func @transform_6(%arg0: i32) -> (i32, i32) {
    %c0_i32 = arith.constant 0 : i32
    %c0_i32_0 = arith.constant 0 : i32
    return %arg0, %c0_i32 : i32, i32
  }
}

</mosaic_0001>

<llo_original>
// kernel: tpu_custom_call.1
$region0: #{tpu_custom_call.1}
  #allocation0 [shape = 'u32[]', space=smem, size = 0x4, offset = 0x4, fixed_abs, tag = 'smem constant byte address 0x4 - core index']
  #allocation1 [shape = 'u32[72,128]{1,0:T(1,128)}', space=vmem, size = 0x9000, scoped, tag = 'internal scratch']
  %s0 = inlined_call_operand.vmem [shape: f32[32,16], index: 0, kind: input, shape index: {}]
  %s1 = inlined_call_operand.vmem [shape: f32[32,16], index: 1, kind: input, shape index: {}]
  %s2 = inlined_call_operand.vmem [shape: f32[32,256], index: 2, kind: input, shape index: {}]
  %s3 = inlined_call_operand.vmem [shape: f32[1,256], index: 3, kind: input, shape index: {}]
  %s4 = inlined_call_operand.hbm [shape: f32[128,128], index: 4, kind: input, shape index: {}]
  %s5 = inlined_call_operand.vmem [shape: f32[1,128], index: 5, kind: input, shape index: {}]
  %s6 = inlined_call_operand.hbm [shape: f32[32,32], index: 6, kind: output, shape index: {}]
  %s7 = sld [smem:[#allocation0]]
  $region61: #{tpu_custom_call.1} parent=0
    _
  %s9 = ssub.s32 1, %s7
  %s10 = scalar_select 0, %s9, %s7
  $region1: #{tpu_custom_call.1} parent=0
    #allocation2 [shape = 'u8[65536]{0}', space=vmem, size = 0x10000, scoped, tag = 'input window, operand 4, single buffered']
    #allocation3 [shape = 's32[2]{0}', space=sflag, size = 0x8, scoped, tag = 'scoped memory for tpu_custom_call.1']
    #allocation4 [shape = 's32[2]{0}', space=sflag, size = 0x8, scoped, tag = 'scoped memory for tpu_custom_call.1']
    #allocation5 [shape = 'u8[16384]{0}', space=vmem, size = 0x4000, scoped, tag = 'output window, operand 0']
    %11 = vsyncpa [#allocation3], 0
    %12 = vsyncpa [#allocation4], 0
    %s13 = scalar_lea.sflag [#allocation4], 1
    %14 = vsyncpa %s13, 0
    loop: start=0, step=1, limit=4
    $region2: #{tpu_custom_call.1} parent=1 // loop_pre_header
      _
    $region3: #{tpu_custom_call.1} parent=1 // loop_header
      %s16 = sphi 0, %s20
      %p17 = scmp.ge.s32.totalorder %s16, 4
      %s26 = sphi 0, %s28
      %s29 = sphi 0, %s26
      %s30 = sphi 0, %s29
      %s46 = sphi 0, %s30
      %s52 = sphi 0, %s54
      %s55 = sphi 0, %s52
      %s56 = sphi 0, %s55
      %s72 = sphi 0, %s56
      %s76 = sphi 0, %s76
      %s78 = sphi 0, %s76
      %s79 = sphi 0, %s78
      %s93 = sphi 0, %s79
      %s97 = sphi 0, %s97
      %s99 = sphi 0, %s97
      %s100 = sphi 0, %s99
      %s114 = sphi 0, %s100
      %s118 = sphi 0, %s118
      %s120 = sphi 0, %s118
      %s121 = sphi 0, %s120
      %s135 = sphi 0, %s121
      %s139 = sphi 0, %s139
      %s141 = sphi 0, %s139
      %s142 = sphi 0, %s141
      %s156 = sphi 0, %s142
      %s162 = sphi 0, %s164
      %s165 = sphi 0, %s162
      %s166 = sphi 0, %s165
      %s182 = sphi 0, %s166
    $region4: #{tpu_custom_call.1} parent=1 // loop_header_branch
      %19 = sbr.rel (%p17) target = $region8
    $region5: #{tpu_custom_call.1} parent=1 // loop_body
      %s21 = ssub.s32 %s16, 1
      %s22 = ssub.s32 %s16, 2
      %s23 = sadd.s32 %s16, 1
      %s24 = ssub.s32 %s16, %s23
      %p25 = scmp.eq.s32.totalorder %s24, 0
      %s27 = sadd.s32 %s26, 1
      %s28 = scalar_select %p25, %s26, %s27
      %p31 = pneg %p25
      %p32 = scmp.eq.s32.totalorder %s16, 1
      %p33 = por %p31, %p32
      %p34 = scmp.ne.s32.totalorder %s26, %s29
      %p35 = scmp.eq.s32.totalorder %s16, 0
      %p36 = por %p34, %p35
      %p37 = scmp.ne.s32.totalorder %s26, %s29
      %p38 = scmp.eq.s32.totalorder %s21, 1
      %p39 = por %p37, %p38
      %p40 = scmp.ne.s32.totalorder %s29, %s30
      %p41 = scmp.eq.s32.totalorder %s21, 0
      %p42 = por %p40, %p41
      %p43 = scmp.ne.s32.totalorder %s29, %s30
      %p44 = scmp.eq.s32.totalorder %s22, 1
      %p45 = por %p43, %p44
      %p47 = scmp.ne.s32.totalorder %s30, %s46
      %p48 = scmp.eq.s32.totalorder %s22, 0
      %p49 = por %p47, %p48
      %s50 = ssub.s32 %s16, %s23
      %p51 = scmp.eq.s32.totalorder %s50, 0
      %s53 = sadd.s32 %s52, 1
      %s54 = scalar_select %p51, %s52, %s53
      %p57 = pneg %p51
      %p58 = scmp.eq.s32.totalorder %s16, 1
      %p59 = por %p57, %p58
      %p60 = scmp.ne.s32.totalorder %s52, %s55
      %p61 = scmp.eq.s32.totalorder %s16, 0
      %p62 = por %p60, %p61
      %p63 = scmp.ne.s32.totalorder %s52, %s55
      %p64 = scmp.eq.s32.totalorder %s21, 1
      %p65 = por %p63, %p64
      %p66 = scmp.ne.s32.totalorder %s55, %s56
      %p67 = scmp.eq.s32.totalorder %s21, 0
      %p68 = por %p66, %p67
      %p69 = scmp.ne.s32.totalorder %s55, %s56
      %p70 = scmp.eq.s32.totalorder %s22, 1
      %p71 = por %p69, %p70
      %p73 = scmp.ne.s32.totalorder %s56, %s72
      %p74 = scmp.eq.s32.totalorder %s22, 0
      %p75 = por %p73, %p74
      %s77 = sadd.s32 %s76, 1
      %p80 = scmp.eq.s32.totalorder %s16, 1
      %p81 = scmp.ne.s32.totalorder %s76, %s78
      %p82 = scmp.eq.s32.totalorder %s16, 0
      %p83 = por %p81, %p82
      %p84 = scmp.ne.s32.totalorder %s76, %s78
      %p85 = scmp.eq.s32.totalorder %s21, 1
      %p86 = por %p84, %p85
      %p87 = scmp.ne.s32.totalorder %s78, %s79
      %p88 = scmp.eq.s32.totalorder %s21, 0
      %p89 = por %p87, %p88
      %p90 = scmp.ne.s32.totalorder %s78, %s79
      %p91 = scmp.eq.s32.totalorder %s22, 1
      %p92 = por %p90, %p91
      %p94 = scmp.ne.s32.totalorder %s79, %s93
      %p95 = scmp.eq.s32.totalorder %s22, 0
      %p96 = por %p94, %p95
      %s98 = sadd.s32 %s97, 1
      %p101 = scmp.eq.s32.totalorder %s16, 1
      %p102 = scmp.ne.s32.totalorder %s97, %s99
      %p103 = scmp.eq.s32.totalorder %s16, 0
      %p104 = por %p102, %p103
      %p105 = scmp.ne.s32.totalorder %s97, %s99
      %p106 = scmp.eq.s32.totalorder %s21, 1
      %p107 = por %p105, %p106
      %p108 = scmp.ne.s32.totalorder %s99, %s100
      %p109 = scmp.eq.s32.totalorder %s21, 0
      %p110 = por %p108, %p109
      %p111 = scmp.ne.s32.totalorder %s99, %s100
      %p112 = scmp.eq.s32.totalorder %s22, 1
      %p113 = por %p111, %p112
      %p115 = scmp.ne.s32.totalorder %s100, %s114
      %p116 = scmp.eq.s32.totalorder %s22, 0
      %p117 = por %p115, %p116
      %s119 = sadd.s32 %s118, 1
      %p122 = scmp.eq.s32.totalorder %s16, 1
      %p123 = scmp.ne.s32.totalorder %s118, %s120
      %p124 = scmp.eq.s32.totalorder %s16, 0
      %p125 = por %p123, %p124
      %p126 = scmp.ne.s32.totalorder %s118, %s120
      %p127 = scmp.eq.s32.totalorder %s21, 1
      %p128 = por %p126, %p127
      %p129 = scmp.ne.s32.totalorder %s120, %s121
      %p130 = scmp.eq.s32.totalorder %s21, 0
      %p131 = por %p129, %p130
      %p132 = scmp.ne.s32.totalorder %s120, %s121
      %p133 = scmp.eq.s32.totalorder %s22, 1
      %p134 = por %p132, %p133
      %p136 = scmp.ne.s32.totalorder %s121, %s135
      %p137 = scmp.eq.s32.totalorder %s22, 0
      %p138 = por %p136, %p137
      %s140 = sadd.s32 %s139, 1
      %p143 = scmp.eq.s32.totalorder %s16, 1
      %p144 = scmp.ne.s32.totalorder %s139, %s141
      %p145 = scmp.eq.s32.totalorder %s16, 0
      %p146 = por %p144, %p145
      %p147 = scmp.ne.s32.totalorder %s139, %s141
      %p148 = scmp.eq.s32.totalorder %s21, 1
      %p149 = por %p147, %p148
      %p150 = scmp.ne.s32.totalorder %s141, %s142
      %p151 = scmp.eq.s32.totalorder %s21, 0
      %p152 = por %p150, %p151
      %p153 = scmp.ne.s32.totalorder %s141, %s142
      %p154 = scmp.eq.s32.totalorder %s22, 1
      %p155 = por %p153, %p154
      %p157 = scmp.ne.s32.totalorder %s142, %s156
      %p158 = scmp.eq.s32.totalorder %s22, 0
      %p159 = por %p157, %p158
      %s160 = ssub.s32 %s16, %s23
      %p161 = scmp.eq.s32.totalorder %s160, 0
      %s163 = sadd.s32 %s162, 1
      %s164 = scalar_select %p161, %s162, %s163
      %p167 = pneg %p161
      %p168 = scmp.eq.s32.totalorder %s16, 1
      %p169 = por %p167, %p168
      %p170 = scmp.ne.s32.totalorder %s162, %s165
      %p171 = scmp.eq.s32.totalorder %s16, 0
      %p172 = por %p170, %p171
      %p173 = scmp.ne.s32.totalorder %s162, %s165
      %p174 = scmp.eq.s32.totalorder %s21, 1
      %p175 = por %p173, %p174
      %p176 = scmp.ne.s32.totalorder %s165, %s166
      %p177 = scmp.eq.s32.totalorder %s21, 0
      %p178 = por %p176, %p177
      %p179 = scmp.ne.s32.totalorder %s165, %s166
      %p180 = scmp.eq.s32.totalorder %s22, 1
      %p181 = por %p179, %p180
      %p183 = scmp.ne.s32.totalorder %s166, %s182
      %p184 = scmp.eq.s32.totalorder %s22, 0
      %p185 = por %p183, %p184
      %p186 = scmp.le.s32.totalorder 1, %s16
      %p187 = scmp.lt.s32.totalorder %s16, 3
      %p188 = pnand %p186, %p187
      %p189 = pneg %p188
      // Predicated region
      $region9: #{tpu_custom_call.1} parent=5 // pred_check
        _
      $region10: #{tpu_custom_call.1} parent=5 // pred_check_branch
        %191 = sbr.rel (%p188) target = $region12
      $region11: #{tpu_custom_call.1} parent=5 // pred_region
        %s192 = ssub.s32 %s16, 1
        // Predicated region
        $region13: #{tpu_custom_call.1} parent=11 // pred_check
          %p193 = pneg %p89
        $region14: #{tpu_custom_call.1} parent=11 // pred_check_branch
          %195 = sbr.rel (%p193) target = $region16
        $region15: #{tpu_custom_call.1} parent=11 // pred_region
          _
        $region16: #{tpu_custom_call.1} parent=11 // pred_fallthru
          _
        // Predicated region
        $region17: #{tpu_custom_call.1} parent=11 // pred_check
          %p196 = pneg %p110
        $region18: #{tpu_custom_call.1} parent=11 // pred_check_branch
          %198 = sbr.rel (%p196) target = $region20
        $region19: #{tpu_custom_call.1} parent=11 // pred_region
          _
        $region20: #{tpu_custom_call.1} parent=11 // pred_fallthru
          _
        // Predicated region
        $region21: #{tpu_custom_call.1} parent=11 // pred_check
          %p199 = pneg %p131
        $region22: #{tpu_custom_call.1} parent=11 // pred_check_branch
          %201 = sbr.rel (%p199) target = $region24
        $region23: #{tpu_custom_call.1} parent=11 // pred_region
          %203 = vsyncadd [#allocation3], 0
          %s204 = sshll.u32 %s4, 4
          %s205 = int_to_ptr.hbm [resolvable:$true] %s204
          %s206 = sshll.u32 [#allocation2], 4
          %s207 = int_to_ptr.vmem [resolvable:$true] %s206
          %212 = dma.hbm_to_vmem [thread:$0]  %s205, 2048, %s207, [#allocation3], 128, 128, 8
        $region24: #{tpu_custom_call.1} parent=11 // pred_fallthru
          _
        // Predicated region
        $region25: #{tpu_custom_call.1} parent=11 // pred_check
          %p213 = pneg %p152
        $region26: #{tpu_custom_call.1} parent=11 // pred_check_branch
          %215 = sbr.rel (%p213) target = $region28
        $region27: #{tpu_custom_call.1} parent=11 // pred_region
          _
        $region28: #{tpu_custom_call.1} parent=11 // pred_fallthru
          _
      $region12: #{tpu_custom_call.1} parent=5 // pred_fallthru
        _
      %p216 = scmp.lt.s32.totalorder %s16, 2
      // Predicated region
      $region29: #{tpu_custom_call.1} parent=5 // pred_check
        %p217 = pneg %p216
      $region30: #{tpu_custom_call.1} parent=5 // pred_check_branch
        %219 = sbr.rel (%p217) target = $region32
      $region31: #{tpu_custom_call.1} parent=5 // pred_region
        // Predicated region
        $region33: #{tpu_custom_call.1} parent=31 // pred_check
          %p220 = pneg %p36
        $region34: #{tpu_custom_call.1} parent=31 // pred_check_branch
          %222 = sbr.rel (%p220) target = $region36
        $region35: #{tpu_custom_call.1} parent=31 // pred_region
          %s223 = smul.u32 2, %s16
          %p224 = scmp.lt.s32.totalorder %s223, 3
          %s225 = scalar_select %p224, %s223, 3
          %s226 = smul.addr %s225, 8
          %s227 = scalar_lea.vmem %s0, %s226
          %s228 = smul.u32 2, %s16
        $region36: #{tpu_custom_call.1} parent=31 // pred_fallthru
          _
        // Predicated region
        $region37: #{tpu_custom_call.1} parent=31 // pred_check
          %p229 = pneg %p62
        $region38: #{tpu_custom_call.1} parent=31 // pred_check_branch
          %231 = sbr.rel (%p229) target = $region40
        $region39: #{tpu_custom_call.1} parent=31 // pred_region
          %s232 = smul.u32 2, %s16
          %p233 = scmp.lt.s32.totalorder %s232, 3
          %s234 = scalar_select %p233, %s232, 3
          %s235 = smul.addr %s234, 8
          %s236 = scalar_lea.vmem %s1, %s235
          %s237 = smul.u32 2, %s16
        $region40: #{tpu_custom_call.1} parent=31 // pred_fallthru
          _
      $region32: #{tpu_custom_call.1} parent=5 // pred_fallthru
        _
      %p238 = scmp.le.s32.totalorder 1, %s16
      %p239 = scmp.lt.s32.totalorder %s16, 3
      %p240 = pnand %p238, %p239
      %p241 = pneg %p240
      // Predicated region
      $region41: #{tpu_custom_call.1} parent=5 // pred_check
        _
      $region42: #{tpu_custom_call.1} parent=5 // pred_check_branch
        %243 = sbr.rel (%p240) target = $region44
      $region43: #{tpu_custom_call.1} parent=5 // pred_region
        %s244 = ssub.s32 %s16, 1
        // Predicated region
        $region45: #{tpu_custom_call.1} parent=43 // pred_check
          %p245 = pneg %p131
        $region46: #{tpu_custom_call.1} parent=43 // pred_check_branch
          %247 = sbr.rel (%p245) target = $region48
        $region47: #{tpu_custom_call.1} parent=43 // pred_region
          %249 = dma.done [#allocation3], 2048
        $region48: #{tpu_custom_call.1} parent=43 // pred_fallthru
          _
        %s250 = smul.u32 2, %s21
        %p251 = scmp.lt.s32.totalorder %s250, 3
        %s252 = scalar_select %p251, %s250, 3
        %s253 = smul.addr %s252, 8
        %s254 = scalar_lea.vmem %s0, %s253
        %p255 = pneg %p42
        %p256 = pneg %p39
        %s257 = smul.u32 2, %s21
        %p258 = scmp.lt.s32.totalorder %s257, 3
        %s259 = scalar_select %p258, %s257, 3
        %s260 = smul.addr %s259, 8
        %s261 = scalar_lea.vmem %s1, %s260
        %p262 = pneg %p68
        %p263 = pneg %p65
        %p264 = pneg %p89
        %p265 = pneg %p86
        %p266 = pneg %p110
        %p267 = pneg %p107
        %p268 = pneg %p131
        %p269 = pneg %p128
        %p270 = pneg %p152
        %p271 = pneg %p149
        %p272 = pneg %p178
        %p273 = pneg %p175
        %s274 = sand.u32 %s165, 1
        %s275 = scalar_lea.sflag [#allocation4], %s274
        %s276 = sand.u32 %s165, 1
        %s277 = smul.addr %s276, 16
        %s278 = scalar_lea.vmem [#allocation5], %s277
        %s279 = smul.u32 2, %s21
        %p280 = scmp.lt.s32.totalorder %s279, 3
        %s281 = scalar_select %p280, %s279, 3
        %s282 = smul.addr %s281, 8
        %s283 = scalar_lea.vmem %s0, %s282
        %s284 = smul.u32 2, %s21
        %s285 = smul.u32 2, %s21
        %p286 = scmp.lt.s32.totalorder %s285, 3
        %s287 = scalar_select %p286, %s285, 3
        %s288 = smul.addr %s287, 8
        %s289 = scalar_lea.vmem %s1, %s288
        %s290 = smul.u32 2, %s21
        %s291 = smul.u32 2, %s21
        %v292 = vld [vmem:[%s283] sm:$0xff]
        %v293 = vld [vmem:[%s283 + $0x8] sm:$0xff]
        %v294 = vld [vmem:[%s289] sm:$0xff]
        %v295 = vld [vmem:[%s289 + $0x8] sm:$0xff]
        %298 = vrot.lane.b32.xlu0 %v294, 16
        %v299 = vpop.permute.xlu0 %298
        %300 = vrot.lane.b32.xlu0 %v295, 16
        %v301 = vpop.permute.xlu0 %300
        %vm304 = vcmask 130048
        %v305 = vsel %vm304, %v292, %v299
        %v306 = vsel %vm304, %v293, %v301
        %v307 = vld [vmem:[%s2] sm:$0xff]
        %v308 = vld [vmem:[%s2 + $0x8] sm:$0xff]
        %v309 = vld [vmem:[%s2 + $0x10] sm:$0xff]
        %v310 = vld [vmem:[%s2 + $0x18] sm:$0xff]
        %v311 = vld [vmem:[%s2 + $0x20] sm:$0xff]
        %v312 = vld [vmem:[%s2 + $0x28] sm:$0xff]
        %v313 = vld [vmem:[%s2 + $0x30] sm:$0xff]
        %v314 = vld [vmem:[%s2 + $0x38] sm:$0xff]
        %v315 = vld [vmem:[%s3] sm:$0x3]
        %v317 = vperm.slane %v315, 0
        %v318 = vperm.slane %v315, 1
        %vm321 = vcmask 261120
        %v323 = vsel %vm321, %v305, 0
        %v326 = vsel %vm321, %v306, 0
        %328 = vmatpush.msra.mxu0 0.0
        %329 = vmatpush.msra.mxu0 0.0
        %330 = vmatpush.msra.mxu0 0.0
        %331 = vmatpush.msra.mxu0 0.0
        %332 = vmatpush.msra.mxu0 0.0
        %333 = vmatpush.msra.mxu0 0.0
        %334 = vmatpush.msra.mxu0 0.0
        %335 = vmatpush.msra.mxu0 0.0
        %336 = vmatpush.msra.mxu0 0.0
        %337 = vmatpush.msra.mxu0 0.0
        %338 = vmatpush.msra.mxu0 0.0
        %339 = vmatpush.msra.mxu0 0.0
        %340 = vmatpush.msra.mxu0 %v313
        %341 = vmatpush.msra.mxu0 %v311
        %342 = vmatpush.msra.mxu0 %v309
        %343 = vmatpush.msra.mxu0 %v307
        %344 = vmatmul.f32.gmra.mxu0 %v323
        %v345 = vpop.f32.mrf.mxu0
        %v346 = vadd.f32 %v317, %v345
        %347 = vmatmul.f32.gmra.mxu0 %v326
        %v348 = vpop.f32.mrf.mxu0
        %v349 = vadd.f32 %v317, %v348
        %350 = vdwg.mxu0
        %351 = vmatpush.msra.mxu0 0.0
        %352 = vmatpush.msra.mxu0 0.0
        %353 = vmatpush.msra.mxu0 0.0
        %354 = vmatpush.msra.mxu0 0.0
        %355 = vmatpush.msra.mxu0 0.0
        %356 = vmatpush.msra.mxu0 0.0
        %357 = vmatpush.msra.mxu0 0.0
        %358 = vmatpush.msra.mxu0 0.0
        %359 = vmatpush.msra.mxu0 0.0
        %360 = vmatpush.msra.mxu0 0.0
        %361 = vmatpush.msra.mxu0 0.0
        %362 = vmatpush.msra.mxu0 0.0
        %363 = vmatpush.msra.mxu0 %v314
        %364 = vmatpush.msra.mxu0 %v312
        %365 = vmatpush.msra.mxu0 %v310
        %366 = vmatpush.msra.mxu0 %v308
        %367 = vmatmul.f32.gmra.mxu0 %v323
        %v368 = vpop.f32.mrf.mxu0
        %v369 = vadd.f32 %v318, %v368
        %370 = vmatmul.f32.gmra.mxu0 %v326
        %v371 = vpop.f32.mrf.mxu0
        %v372 = vadd.f32 %v318, %v371
        %373 = vdwg.mxu0
        %v374 = vmax.f32 %v346, 0.0
        %v375 = vmax.f32 %v349, 0.0
        %v376 = vld [vmem:[#allocation2] sm:$0xff]
        %v377 = vld [vmem:[#allocation2 + $0x8] sm:$0xff]
        %v378 = vld [vmem:[#allocation2 + $0x10] sm:$0xff]
        %v379 = vld [vmem:[#allocation2 + $0x18] sm:$0xff]
        %v380 = vld [vmem:[#allocation2 + $0x20] sm:$0xff]
        %v381 = vld [vmem:[#allocation2 + $0x28] sm:$0xff]
        %v382 = vld [vmem:[#allocation2 + $0x30] sm:$0xff]
        %v383 = vld [vmem:[#allocation2 + $0x38] sm:$0xff]
        %v384 = vld [vmem:[#allocation2 + $0x40] sm:$0xff]
        %v385 = vld [vmem:[#allocation2 + $0x48] sm:$0xff]
        %v386 = vld [vmem:[#allocation2 + $0x50] sm:$0xff]
        %v387 = vld [vmem:[#allocation2 + $0x58] sm:$0xff]
        %v388 = vld [vmem:[#allocation2 + $0x60] sm:$0xff]
        %v389 = vld [vmem:[#allocation2 + $0x68] sm:$0xff]
        %v390 = vld [vmem:[#allocation2 + $0x70] sm:$0xff]
        %v391 = vld [vmem:[#allocation2 + $0x78] sm:$0xff]
        %v392 = vld [vmem:[%s5] sm:$0x1]
        %v394 = vperm.slane %v392, 0
        %396 = vmatpush.msra.mxu0 %v391
        %397 = vmatpush.msra.mxu0 %v390
        %398 = vmatpush.msra.mxu0 %v389
        %399 = vmatpush.msra.mxu0 %v388
        %400 = vmatpush.msra.mxu0 %v387
        %401 = vmatpush.msra.mxu0 %v386
        %402 = vmatpush.msra.mxu0 %v385
        %403 = vmatpush.msra.mxu0 %v384
        %404 = vmatpush.msra.mxu0 %v383
        %405 = vmatpush.msra.mxu0 %v382
        %406 = vmatpush.msra.mxu0 %v381
        %407 = vmatpush.msra.mxu0 %v380
        %408 = vmatpush.msra.mxu0 %v379
        %409 = vmatpush.msra.mxu0 %v378
        %410 = vmatpush.msra.mxu0 %v377
        %411 = vmatpush.msra.mxu0 %v376
        %412 = vmatmul.f32.gmra.mxu0 %v374
        %v413 = vpop.f32.mrf.mxu0
        %v414 = vadd.f32 %v394, %v413
        %415 = vmatmul.f32.gmra.mxu0 %v375
        %v416 = vpop.f32.mrf.mxu0
        %v417 = vadd.f32 %v394, %v416
        %418 = vdwg.mxu0
        %v419 = vmax.f32 %v414, 0.0
        %v420 = vmax.f32 %v417, 0.0
        %v421 = vmul.f32 %v419, %v369
        %v422 = vmul.f32 %v420, %v372
        %423 = vrot.lane.b32.xlu0 %v421, 64
        %v424 = vpop.permute.xlu0 %423
        %425 = vrot.lane.b32.xlu0 %v422, 64
        %v426 = vpop.permute.xlu0 %425
        %v427 = vadd.f32 %v421, %v424
        %v428 = vadd.f32 %v422, %v426
        %429 = vrot.lane.b32.xlu0 %v427, 32
        %v430 = vpop.permute.xlu0 %429
        %431 = vrot.lane.b32.xlu0 %v428, 32
        %v432 = vpop.permute.xlu0 %431
        %v433 = vadd.f32 %v427, %v430
        %v434 = vadd.f32 %v428, %v432
        %435 = vst.msk [vmem:[%s278] sm:$0xff] %vm321, %v433
        %436 = vst.msk [vmem:[%s278 + $0x8] sm:$0xff] %vm321, %v434
        %s437 = sand.u32 %s165, 1
        %s438 = scalar_lea.sflag [#allocation4], %s437
        %s439 = sand.u32 %s165, 1
        %s440 = smul.addr %s439, 16
        %s441 = scalar_lea.vmem [#allocation5], %s440
        // Predicated region
        $region49: #{tpu_custom_call.1} parent=43 // pred_check
          %p442 = pneg %p175
        $region50: #{tpu_custom_call.1} parent=43 // pred_check_branch
          %444 = sbr.rel (%p442) target = $region52
        $region51: #{tpu_custom_call.1} parent=43 // pred_region
          %s445 = smul.u32 2, %s21
          %447 = vsyncadd %s438, 0
          %s448 = smul.addr %s445, 8
          %s449 = scalar_lea.hbm %s6, %s448
          %s450 = sshll.u32 %s441, 4
          %s451 = int_to_ptr.vmem [resolvable:$true] %s450
          %s452 = sshll.u32 %s449, 4
          %s453 = int_to_ptr.hbm [resolvable:$true] %s452
          %458 = dma.vmem_to_hbm [thread:$0]  %s451, 256, %s453, %s438, 128, 128, 8
        $region52: #{tpu_custom_call.1} parent=43 // pred_fallthru
          _
      $region44: #{tpu_custom_call.1} parent=5 // pred_fallthru
        _
      %p459 = scmp.le.s32.totalorder 2, %s16
      // Predicated region
      $region53: #{tpu_custom_call.1} parent=5 // pred_check
        %p460 = pneg %p459
      $region54: #{tpu_custom_call.1} parent=5 // pred_check_branch
        %462 = sbr.rel (%p460) target = $region56
      $region55: #{tpu_custom_call.1} parent=5 // pred_region
        %s463 = ssub.s32 %s16, 2
        // Predicated region
        $region57: #{tpu_custom_call.1} parent=55 // pred_check
          %p464 = pneg %p181
        $region58: #{tpu_custom_call.1} parent=55 // pred_check_branch
          %466 = sbr.rel (%p464) target = $region60
        $region59: #{tpu_custom_call.1} parent=55 // pred_region
          %s467 = sand.u32 %s166, 1
          %s468 = scalar_lea.sflag [#allocation4], %s467
          %s469 = sand.u32 %s166, 1
          %s470 = smul.addr %s469, 16
          %s471 = scalar_lea.vmem [#allocation5], %s470
          %473 = dma.done %s468, 256
        $region60: #{tpu_custom_call.1} parent=55 // pred_fallthru
          _
      $region56: #{tpu_custom_call.1} parent=5 // pred_fallthru
        _
    $region6: #{tpu_custom_call.1} parent=1 // loop_footer
      %s20 = sadd.s32 1, %s16
    $region7: #{tpu_custom_call.1} parent=1 // loop_footer_branch
      %15 = sbr.rel target = $region3
    $region8: #{tpu_custom_call.1} parent=1 // loop_exit
      _
    %474 = vsyncpa [#allocation3], 1
    %s475 = scalar_lea.sflag [#allocation3], 1
    %476 = vsyncpa %s475, 1
    %477 = vsyncpa [#allocation4], 1
    %s478 = scalar_lea.sflag [#allocation4], 1
    %479 = vsyncpa %s478, 1

</llo_original>
